<compile_context>
chip_gen: v7x
topology: tpu7x:2x2x1
jax: 0.10.0
libtpu: 0.0.40
codegen_flags: <defaults>
</compile_context>

<pallas_src>
import jax
import jax.numpy as jnp
from jax.experimental import pallas as pl
from jax.experimental.pallas import tpu as pltpu


def _chamfer_kernel(lhs_ref, rhs_ref, p2g_ref, g2p_ref, rowmin_ref):
    """One (batch, gt-tile) grid step.

    lhs_ref   : (1, N, 5)   [p, ||p||^2, 1]            (resident over gt tiles)
    rhs_ref   : (1, 5, TG)  [-2g, 1, ||g||^2]^T        (lane-dense, streamed)
    p2g_ref   : (1, N, 1)   min_j ||p_i - g_j||^2      (resident; written at last tile)
    g2p_ref   : (1, 1, TG)  min_i ||p_i - g_j||^2      (final per tile; lane-dense)
    rowmin_ref: (N, 1) f32  running pred->gt row-min scratch
    """
    t = pl.program_id(1)

    # Entire squared-distance tile on the MXU (K = 5):
    #   d2_ij = ||p_i||^2 + ||g_j||^2 - 2 <p_i, g_j>
    d2 = jnp.dot(lhs_ref[0], rhs_ref[0],
                 preferred_element_type=jnp.float32)          # (N, TG)

    @pl.when(t == 0)
    def _init():
        rowmin_ref[...] = jnp.full_like(rowmin_ref, jnp.inf)

    # pred -> gt : fold this tile's lane-min into the running row-min.
    rowmin_ref[...] = jnp.minimum(rowmin_ref[...],
                                  jnp.min(d2, axis=1, keepdims=True))

    # gt -> pred : all pred rows are present, so the column-min is already final.
    # Clamp at 0 to guard against cancellation in the expanded-norm form.
    g2p_ref[0, :, :] = jnp.maximum(jnp.min(d2, axis=0, keepdims=True), 0.0)

    @pl.when(t == pl.num_programs(1) - 1)
    def _finalize():
        p2g_ref[0, :, :] = jnp.maximum(rowmin_ref[...], 0.0)


def _pick_gt_tile(n):
    """Largest 128-aligned gt tile dividing N with the f32 (N, TG) distance
    tile under ~4 MiB (fits default scoped VMEM on v5e/v6e/v7x)."""
    budget_elems = (4 * 1024 * 1024) // 4
    for cand in (512, 256, 128):
        if n % cand == 0 and n * cand <= budget_elems:
            return cand
    if n % 128 == 0:
        return 128
    return n  # small / non-128-multiple N: single full-width tile


def chamfer_pointwise_loss(pred, gt):
    """Per-point chamfer loss, shape (B, N), computed with a Pallas kernel."""
    B, N, C = pred.shape
    assert C == 3 and gt.shape == pred.shape

    pred = pred.astype(jnp.float32)
    gt = gt.astype(jnp.float32)

    # Augmented operands so the whole distance expansion runs on the MXU.
    p_norm = jnp.sum(pred * pred, axis=-1, keepdims=True)        # (B, N, 1)
    g_norm = jnp.sum(gt * gt, axis=-1, keepdims=True)            # (B, N, 1)
    ones = jnp.ones_like(p_norm)
    lhs = jnp.concatenate([pred, p_norm, ones], axis=-1)          # (B, N, 5)
    rhs = jnp.concatenate([-2.0 * gt, ones, g_norm], axis=-1)     # (B, N, 5)
    rhs_t = jnp.transpose(rhs, (0, 2, 1))                         # (B, 5, N) lane-dense

    tg = _pick_gt_tile(N)
    num_gt_tiles = N // tg

    out_p2g, out_g2p = pl.pallas_call(
        _chamfer_kernel,
        out_shape=(
            jax.ShapeDtypeStruct((B, N, 1), jnp.float32),   # pred -> gt mins
            jax.ShapeDtypeStruct((B, 1, N), jnp.float32),   # gt -> pred mins
        ),
        grid_spec=pltpu.PrefetchScalarGridSpec(
            num_scalar_prefetch=0,
            grid=(B, num_gt_tiles),
            in_specs=[
                pl.BlockSpec((1, N, 5), lambda b, t: (b, 0, 0)),   # pred (resident)
                pl.BlockSpec((1, 5, tg), lambda b, t: (b, 0, t)),  # gt tile (streamed)
            ],
            out_specs=[
                pl.BlockSpec((1, N, 1), lambda b, t: (b, 0, 0)),   # resident, final write
                pl.BlockSpec((1, 1, tg), lambda b, t: (b, 0, t)),  # streamed, lane-dense
            ],
            scratch_shapes=[pltpu.VMEM((N, 1), jnp.float32)],      # running row-min
        ),
        compiler_params=pltpu.CompilerParams(
            dimension_semantics=("parallel", "arbitrary"),
            vmem_limit_bytes=32 * 1024 * 1024,
        ),
    )(lhs, rhs_t)

    return out_p2g[:, :, 0] + out_g2p[:, 0, :]       # (B, N)


def chamfer_loss_forward(inputs, targets, weight, avg_factor=None,
                         reduction="mean", loss_weight=1.0):
    """Reproduces ChamferLoss.forward (mmdet @weighted_loss semantics)."""
    # weight: (B, N, 3) -> mean over last dim -> (B, N)
    weight = jnp.mean(weight, axis=-1)

    loss = chamfer_pointwise_loss(inputs, targets)   # (B, N)
    loss = loss * weight                             # elementwise weight

    if avg_factor is None:
        if reduction == "mean":
            loss = jnp.mean(loss)
        elif reduction == "sum":
            loss = jnp.sum(loss)
        # 'none' -> leave as-is
    else:
        if reduction == "mean":
            loss = jnp.sum(loss) / avg_factor
        elif reduction != "none":
            raise ValueError("avg_factor only works with mean/none reduction")

    return loss_weight * loss


def _reference(inputs, targets, weight, reduction="mean", loss_weight=1.0):
    """Pure-JAX reference mirroring the PyTorch module."""
    w = jnp.mean(weight, axis=-1)
    diff = inputs[:, :, None, :] - targets[:, None, :, :]
    d2 = jnp.sum(diff ** 2, axis=-1)
    l = jnp.min(d2, axis=2) + jnp.min(d2, axis=1)
    l = l * w
    if reduction == "mean":
        l = jnp.mean(l)
    elif reduction == "sum":
        l = jnp.sum(l)
    return loss_weight * l


if __name__ == "__main__":
    key = jax.random.PRNGKey(0)
    k1, k2, k3 = jax.random.split(key, 3)

    B, N = 2, 8
    inputs = jax.random.normal(k1, (B, N, 3), dtype=jnp.float32)
    targets = jax.random.normal(k2, (B, N, 3), dtype=jnp.float32)
    weight = jax.random.uniform(k3, (B, N, 3), dtype=jnp.float32)

    # 'mean' reduction (module default)
    loss = chamfer_loss_forward(inputs, targets, weight,
                                reduction="mean", loss_weight=1.0)
    loss = jax.block_until_ready(loss)
    ref = _reference(inputs, targets, weight, reduction="mean", loss_weight=1.0)
    assert jnp.allclose(loss, ref, rtol=1e-4, atol=1e-5), (loss, ref)

    # 'none' reduction (per-point values) for a stricter element-wise check
    loss_n = chamfer_loss_forward(inputs, targets, weight,
                                  reduction="none", loss_weight=1.0)
    loss_n = jax.block_until_ready(loss_n)
    ref_n = _reference(inputs, targets, weight, reduction="none", loss_weight=1.0)
    assert jnp.allclose(loss_n, ref_n, rtol=1e-4, atol=1e-5)

    print("KERNEL_OK")
</pallas_src>

<mosaic_0001>
module attributes {stable_mosaic.version = 11 : i64} {
  func.func @_chamfer_kernel(%arg0: i32, %arg1: i32, %arg2: memref<1x8x5xf32, #tpu.memory_space<vmem>>, %arg3: memref<1x5x8xf32, #tpu.memory_space<vmem>>, %arg4: memref<1x8x1xf32, #tpu.memory_space<vmem>>, %arg5: memref<1x1x8xf32, #tpu.memory_space<vmem>>, %arg6: memref<8x1xf32, #tpu.memory_space<vmem>>) attributes {dimension_semantics = [#tpu.dimension_semantics<parallel>, #tpu.dimension_semantics<arbitrary>], iteration_bounds = array<i64: 2, 1>, scalar_prefetch = 0 : i64, scratch_operands = 1 : i64, tpu.core_type = #tpu.core_type<tc>, window_params = [{transform_indices = @transform_0, window_bounds = array<i64: 1, 8, 5>}, {transform_indices = @transform_1, window_bounds = array<i64: 1, 5, 8>}, {transform_indices = @transform_2, window_bounds = array<i64: 1, 8, 1>}, {transform_indices = @transform_3, window_bounds = array<i64: 1, 1, 8>}]} {
    %c0 = arith.constant 0 : index
    %c0_0 = arith.constant 0 : index
    %c0_1 = arith.constant 0 : index
    %0 = vector.load %arg2[%c0, %c0_0, %c0_1] : memref<1x8x5xf32, #tpu.memory_space<vmem>>, vector<1x8x5xf32>
    %1 = vector.shape_cast %0 : vector<1x8x5xf32> to vector<8x5xf32>
    %c0_2 = arith.constant 0 : index
    %c0_3 = arith.constant 0 : index
    %c0_4 = arith.constant 0 : index
    %2 = vector.load %arg3[%c0_2, %c0_3, %c0_4] : memref<1x5x8xf32, #tpu.memory_space<vmem>>, vector<1x5x8xf32>
    %3 = vector.shape_cast %2 : vector<1x5x8xf32> to vector<5x8xf32>
    %cst = arith.constant dense<0.000000e+00> : vector<8x8xf32>
    %4 = tpu.matmul %1, %3, %cst {dimension_numbers = #tpu.dot_dimension_numbers<[1], [0], [0], [1], [0, 0, 1, 1], [], []>} : vector<8x5xf32>, vector<5x8xf32>, vector<8x8xf32> -> vector<8x8xf32>
    %c0_i32 = arith.constant 0 : i32
    %5 = arith.cmpi eq, %arg1, %c0_i32 : i32
    %6 = arith.extui %5 : i1 to i32
    %c0_i32_5 = arith.constant 0 : i32
    %7 = arith.cmpi ne, %6, %c0_i32_5 : i32
    scf.if %7 {
      %cst_18 = arith.constant 0x7F800000 : f32
      %23 = vector.broadcast %cst_18 : f32 to vector<8x1xf32>
      %c0_19 = arith.constant 0 : index
      %c0_20 = arith.constant 0 : index
      %24 = vector.load %arg6[%c0_19, %c0_20] : memref<8x1xf32, #tpu.memory_space<vmem>>, vector<8x1xf32>
      tpu.vector_store %arg6[%c0_19, %c0_20], %23 {strides = array<i32>} : memref<8x1xf32, #tpu.memory_space<vmem>>, vector<8x1xf32>,
    } else {
    }
    %c0_6 = arith.constant 0 : index
    %c0_7 = arith.constant 0 : index
    %8 = vector.load %arg6[%c0_6, %c0_7] : memref<8x1xf32, #tpu.memory_space<vmem>>, vector<8x1xf32>
    %cst_8 = arith.constant dense<0x7F800000> : vector<8xf32>
    %9 = vector.multi_reduction <minimumf>, %4, %cst_8 [1] : vector<8x8xf32> to vector<8xf32>
    %10 = vector.shape_cast %9 : vector<8xf32> to vector<8x1xf32>
    %11 = arith.minimumf %8, %10 : vector<8x1xf32>
    %c0_9 = arith.constant 0 : index
    %c0_10 = arith.constant 0 : index
    %12 = vector.load %arg6[%c0_9, %c0_10] : memref<8x1xf32, #tpu.memory_space<vmem>>, vector<8x1xf32>
    tpu.vector_store %arg6[%c0_9, %c0_10], %11 {strides = array<i32>} : memref<8x1xf32, #tpu.memory_space<vmem>>, vector<8x1xf32>,
    %cst_11 = arith.constant dense<0x7F800000> : vector<8xf32>
    %13 = vector.multi_reduction <minimumf>, %4, %cst_11 [0] : vector<8x8xf32> to vector<8xf32>
    %14 = vector.shape_cast %13 : vector<8xf32> to vector<1x8xf32>
    %cst_12 = arith.constant 0.000000e+00 : f32
    %15 = vector.broadcast %cst_12 : f32 to vector<1x8xf32>
    %16 = arith.maximumf %14, %15 : vector<1x8xf32>
    %c0_13 = arith.constant 0 : index
    %c0_14 = arith.constant 0 : index
    %c0_15 = arith.constant 0 : index
    %17 = vector.load %arg5[%c0_13, %c0_14, %c0_15] : memref<1x1x8xf32, #tpu.memory_space<vmem>>, vector<1x1x8xf32>
    %18 = vector.shape_cast %17 : vector<1x1x8xf32> to vector<1x8xf32>
    %19 = vector.shape_cast %16 : vector<1x8xf32> to vector<1x1x8xf32>
    tpu.vector_store %arg5[%c0_13, %c0_14, %c0_15], %19 {strides = array<i32>} : memref<1x1x8xf32, #tpu.memory_space<vmem>>, vector<1x1x8xf32>,
    %c0_i32_16 = arith.constant 0 : i32
    %20 = arith.cmpi eq, %arg1, %c0_i32_16 : i32
    %21 = arith.extui %20 : i1 to i32
    %c0_i32_17 = arith.constant 0 : i32
    %22 = arith.cmpi ne, %21, %c0_i32_17 : i32
    scf.if %22 {
      %c0_18 = arith.constant 0 : index
      %c0_19 = arith.constant 0 : index
      %23 = vector.load %arg6[%c0_18, %c0_19] : memref<8x1xf32, #tpu.memory_space<vmem>>, vector<8x1xf32>
      %cst_20 = arith.constant 0.000000e+00 : f32
      %24 = vector.broadcast %cst_20 : f32 to vector<8x1xf32>
      %25 = arith.maximumf %23, %24 : vector<8x1xf32>
      %c0_21 = arith.constant 0 : index
      %c0_22 = arith.constant 0 : index
      %c0_23 = arith.constant 0 : index
      %26 = vector.load %arg4[%c0_21, %c0_22, %c0_23] : memref<1x8x1xf32, #tpu.memory_space<vmem>>, vector<1x8x1xf32>
      %27 = vector.shape_cast %26 : vector<1x8x1xf32> to vector<8x1xf32>
      %28 = vector.shape_cast %25 : vector<8x1xf32> to vector<1x8x1xf32>
      tpu.vector_store %arg4[%c0_21, %c0_22, %c0_23], %28 {strides = array<i32>} : memref<1x8x1xf32, #tpu.memory_space<vmem>>, vector<1x8x1xf32>,
    } else {
    }
    return
  }
  func.func @transform_0(%arg0: i32, %arg1: i32) -> (i32, i32, i32) {
    %c0_i32 = arith.constant 0 : i32
    %c0_i32_0 = arith.constant 0 : i32
    %c0_i32_1 = arith.constant 0 : i32
    return %arg0, %c0_i32, %c0_i32_0 : i32, i32, i32
  }
  func.func @transform_1(%arg0: i32, %arg1: i32) -> (i32, i32, i32) {
    %c0_i32 = arith.constant 0 : i32
    %c0_i32_0 = arith.constant 0 : i32
    return %arg0, %c0_i32, %arg1 : i32, i32, i32
  }
  func.func @transform_2(%arg0: i32, %arg1: i32) -> (i32, i32, i32) {
    %c0_i32 = arith.constant 0 : i32
    %c0_i32_0 = arith.constant 0 : i32
    %c0_i32_1 = arith.constant 0 : i32
    return %arg0, %c0_i32, %c0_i32_0 : i32, i32, i32
  }
  func.func @transform_3(%arg0: i32, %arg1: i32) -> (i32, i32, i32) {
    %c0_i32 = arith.constant 0 : i32
    %c0_i32_0 = arith.constant 0 : i32
    return %arg0, %c0_i32, %arg1 : i32, i32, i32
  }
}

</mosaic_0001>

<llo_original>
// kernel: tpu_custom_call.1
$region0: #{tpu_custom_call.1}
  #allocation0 [shape = 'u32[]', space=smem, size = 0x4, offset = 0x4, fixed_abs, tag = 'smem constant byte address 0x4 - core index']
  #allocation1 [shape = 'u32[144,128]{1,0:T(1,128)}', space=vmem, size = 0x12000, scoped, tag = 'internal scratch']
  #allocation2 [shape = 'f32[8,1]{1,0:T(8,128)}', space=vmem, size = 0x1000, scoped, tag = 'scratch operand']
  %s0 = inlined_call_operand.vmem [shape: f32[2,8,5], index: 0, kind: input, shape index: {}]
  %s1 = inlined_call_operand.vmem [shape: f32[2,5,8], index: 1, kind: input, shape index: {}]
  %s2 = inlined_call_operand.vmem [shape: f32[2,8,1], index: 2, kind: output, shape index: {0}]
  %s3 = inlined_call_operand.hbm [shape: f32[2,1,8], index: 3, kind: output, shape index: {1}]
  %4 = xla_tuple %s2, %s3
  %s5 = sld [smem:[#allocation0]]
  $region57: #{tpu_custom_call.1} parent=0
    _
  %s7 = ssub.s32 1, %s5
  %s8 = scalar_select 0, %s7, %s5
  $region1: #{tpu_custom_call.1} parent=0
    #allocation3 [shape = 'u8[1024]{0}', space=vmem, size = 0x400, scoped, tag = 'output window, operand 1']
    #allocation4 [shape = 's32[2]{0}', space=sflag, size = 0x8, scoped, tag = 'scoped memory for tpu_custom_call.1']
    %9 = vsyncpa [#allocation4], 0
    %s10 = scalar_lea.sflag [#allocation4], 1
    %11 = vsyncpa %s10, 0
    loop: start=0, step=1, limit=4
    $region2: #{tpu_custom_call.1} parent=1 // loop_pre_header
      _
    $region3: #{tpu_custom_call.1} parent=1 // loop_header
      %s13 = sphi 0, %s17
      %p14 = scmp.ge.s32.totalorder %s13, 4
      %s20 = sphi 0, %s32
      %s21 = sphi 0, %s28
      %s22 = sphi 0, %s20
      %s23 = sphi 0, %s21
      %s24 = sphi 0, %s22
      %s25 = sphi 0, %s23
      %s35 = sphi 0, %s37
      %s38 = sphi 0, %s35
      %s39 = sphi 0, %s38
      %s55 = sphi 0, %s39
      %s63 = sphi 0, %s65
      %s66 = sphi 0, %s63
      %s67 = sphi 0, %s66
      %s83 = sphi 0, %s67
      %s89 = sphi 0, %s91
      %s92 = sphi 0, %s89
      %s93 = sphi 0, %s92
      %s109 = sphi 0, %s93
      %s117 = sphi 0, %s119
      %s120 = sphi 0, %s117
      %s121 = sphi 0, %s120
      %s137 = sphi 0, %s121
    $region4: #{tpu_custom_call.1} parent=1 // loop_header_branch
      %16 = sbr.rel (%p14) target = $region8
    $region5: #{tpu_custom_call.1} parent=1 // loop_body
      %s18 = ssub.s32 %s13, 1
      %s19 = ssub.s32 %s13, 2
      %s26 = sadd.s32 1, %s21
      %p27 = scmp.ge.s32.totalorder %s26, 1
      %s28 = scalar_select %p27, 0, %s26
      %s29 = sadd.s32 1, %s20
      %s30 = scalar_select %p27, %s29, %s20
      %p31 = scmp.ge.s32.totalorder %s30, 2
      %s32 = scalar_select %p31, 0, %s30
      %s33 = ssub.s32 %s20, %s32
      %p34 = scmp.eq.s32.totalorder %s33, 0
      %s36 = sadd.s32 %s35, 1
      %s37 = scalar_select %p34, %s35, %s36
      %p40 = pneg %p34
      %p41 = scmp.eq.s32.totalorder %s13, 1
      %p42 = por %p40, %p41
      %p43 = scmp.ne.s32.totalorder %s35, %s38
      %p44 = scmp.eq.s32.totalorder %s13, 0
      %p45 = por %p43, %p44
      %p46 = scmp.ne.s32.totalorder %s35, %s38
      %p47 = scmp.eq.s32.totalorder %s18, 1
      %p48 = por %p46, %p47
      %p49 = scmp.ne.s32.totalorder %s38, %s39
      %p50 = scmp.eq.s32.totalorder %s18, 0
      %p51 = por %p49, %p50
      %p52 = scmp.ne.s32.totalorder %s38, %s39
      %p53 = scmp.eq.s32.totalorder %s19, 1
      %p54 = por %p52, %p53
      %p56 = scmp.ne.s32.totalorder %s39, %s55
      %p57 = scmp.eq.s32.totalorder %s19, 0
      %p58 = por %p56, %p57
      %s59 = ssub.s32 %s20, %s32
      %s60 = ssub.s32 %s21, %s28
      %s61 = sor.u32 %s59, %s60
      %p62 = scmp.eq.s32.totalorder %s61, 0
      %s64 = sadd.s32 %s63, 1
      %s65 = scalar_select %p62, %s63, %s64
      %p68 = pneg %p62
      %p69 = scmp.eq.s32.totalorder %s13, 1
      %p70 = por %p68, %p69
      %p71 = scmp.ne.s32.totalorder %s63, %s66
      %p72 = scmp.eq.s32.totalorder %s13, 0
      %p73 = por %p71, %p72
      %p74 = scmp.ne.s32.totalorder %s63, %s66
      %p75 = scmp.eq.s32.totalorder %s18, 1
      %p76 = por %p74, %p75
      %p77 = scmp.ne.s32.totalorder %s66, %s67
      %p78 = scmp.eq.s32.totalorder %s18, 0
      %p79 = por %p77, %p78
      %p80 = scmp.ne.s32.totalorder %s66, %s67
      %p81 = scmp.eq.s32.totalorder %s19, 1
      %p82 = por %p80, %p81
      %p84 = scmp.ne.s32.totalorder %s67, %s83
      %p85 = scmp.eq.s32.totalorder %s19, 0
      %p86 = por %p84, %p85
      %s87 = ssub.s32 %s20, %s32
      %p88 = scmp.eq.s32.totalorder %s87, 0
      %s90 = sadd.s32 %s89, 1
      %s91 = scalar_select %p88, %s89, %s90
      %p94 = pneg %p88
      %p95 = scmp.eq.s32.totalorder %s13, 1
      %p96 = por %p94, %p95
      %p97 = scmp.ne.s32.totalorder %s89, %s92
      %p98 = scmp.eq.s32.totalorder %s13, 0
      %p99 = por %p97, %p98
      %p100 = scmp.ne.s32.totalorder %s89, %s92
      %p101 = scmp.eq.s32.totalorder %s18, 1
      %p102 = por %p100, %p101
      %p103 = scmp.ne.s32.totalorder %s92, %s93
      %p104 = scmp.eq.s32.totalorder %s18, 0
      %p105 = por %p103, %p104
      %p106 = scmp.ne.s32.totalorder %s92, %s93
      %p107 = scmp.eq.s32.totalorder %s19, 1
      %p108 = por %p106, %p107
      %p110 = scmp.ne.s32.totalorder %s93, %s109
      %p111 = scmp.eq.s32.totalorder %s19, 0
      %p112 = por %p110, %p111
      %s113 = ssub.s32 %s20, %s32
      %s114 = ssub.s32 %s21, %s28
      %s115 = sor.u32 %s113, %s114
      %p116 = scmp.eq.s32.totalorder %s115, 0
      %s118 = sadd.s32 %s117, 1
      %s119 = scalar_select %p116, %s117, %s118
      %p122 = pneg %p116
      %p123 = scmp.eq.s32.totalorder %s13, 1
      %p124 = por %p122, %p123
      %p125 = scmp.ne.s32.totalorder %s117, %s120
      %p126 = scmp.eq.s32.totalorder %s13, 0
      %p127 = por %p125, %p126
      %p128 = scmp.ne.s32.totalorder %s117, %s120
      %p129 = scmp.eq.s32.totalorder %s18, 1
      %p130 = por %p128, %p129
      %p131 = scmp.ne.s32.totalorder %s120, %s121
      %p132 = scmp.eq.s32.totalorder %s18, 0
      %p133 = por %p131, %p132
      %p134 = scmp.ne.s32.totalorder %s120, %s121
      %p135 = scmp.eq.s32.totalorder %s19, 1
      %p136 = por %p134, %p135
      %p138 = scmp.ne.s32.totalorder %s121, %s137
      %p139 = scmp.eq.s32.totalorder %s19, 0
      %p140 = por %p138, %p139
      %p141 = scmp.le.s32.totalorder 1, %s13
      %p142 = scmp.lt.s32.totalorder %s13, 3
      %p143 = pnand %p141, %p142
      %p144 = pneg %p143
      // Predicated region
      $region9: #{tpu_custom_call.1} parent=5 // pred_check
        _
      $region10: #{tpu_custom_call.1} parent=5 // pred_check_branch
        %146 = sbr.rel (%p143) target = $region12
      $region11: #{tpu_custom_call.1} parent=5 // pred_region
        %s147 = ssub.s32 %s13, 1
      $region12: #{tpu_custom_call.1} parent=5 // pred_fallthru
        _
      %p148 = scmp.lt.s32.totalorder %s13, 2
      // Predicated region
      $region13: #{tpu_custom_call.1} parent=5 // pred_check
        %p149 = pneg %p148
      $region14: #{tpu_custom_call.1} parent=5 // pred_check_branch
        %151 = sbr.rel (%p149) target = $region16
      $region15: #{tpu_custom_call.1} parent=5 // pred_region
        // Predicated region
        $region17: #{tpu_custom_call.1} parent=15 // pred_check
          %p152 = pneg %p45
        $region18: #{tpu_custom_call.1} parent=15 // pred_check_branch
          %154 = sbr.rel (%p152) target = $region20
        $region19: #{tpu_custom_call.1} parent=15 // pred_region
          %p155 = scmp.lt.s32.totalorder %s20, 1
          %s156 = scalar_select %p155, %s20, 1
          %s157 = smul.addr %s156, 8
          %s158 = scalar_lea.vmem %s0, %s157
        $region20: #{tpu_custom_call.1} parent=15 // pred_fallthru
          _
        // Predicated region
        $region21: #{tpu_custom_call.1} parent=15 // pred_check
          %p159 = pneg %p73
        $region22: #{tpu_custom_call.1} parent=15 // pred_check_branch
          %161 = sbr.rel (%p159) target = $region24
        $region23: #{tpu_custom_call.1} parent=15 // pred_region
          %p162 = scmp.lt.s32.totalorder %s20, 1
          %s163 = scalar_select %p162, %s20, 1
          %p164 = scmp.lt.s32.totalorder %s21, 0
          %s165 = scalar_select %p164, %s21, 0
          %s166 = sadd.s32 %s165, %s163
          %s167 = smul.addr %s166, 8
          %s168 = scalar_lea.vmem %s1, %s167
        $region24: #{tpu_custom_call.1} parent=15 // pred_fallthru
          _
      $region16: #{tpu_custom_call.1} parent=5 // pred_fallthru
        _
      %p169 = scmp.le.s32.totalorder 1, %s13
      %p170 = scmp.lt.s32.totalorder %s13, 3
      %p171 = pnand %p169, %p170
      %p172 = pneg %p171
      // Predicated region
      $region25: #{tpu_custom_call.1} parent=5 // pred_check
        _
      $region26: #{tpu_custom_call.1} parent=5 // pred_check_branch
        %174 = sbr.rel (%p171) target = $region28
      $region27: #{tpu_custom_call.1} parent=5 // pred_region
        %s175 = ssub.s32 %s13, 1
        %p176 = scmp.lt.s32.totalorder %s22, 1
        %s177 = scalar_select %p176, %s22, 1
        %s178 = smul.addr %s177, 8
        %s179 = scalar_lea.vmem %s0, %s178
        %p180 = pneg %p51
        %p181 = pneg %p48
        %p182 = scmp.lt.s32.totalorder %s22, 1
        %s183 = scalar_select %p182, %s22, 1
        %p184 = scmp.lt.s32.totalorder %s23, 0
        %s185 = scalar_select %p184, %s23, 0
        %s186 = sadd.s32 %s185, %s183
        %s187 = smul.addr %s186, 8
        %s188 = scalar_lea.vmem %s1, %s187
        %p189 = pneg %p79
        %p190 = pneg %p76
        %p191 = pneg %p105
        %p192 = pneg %p102
        %p193 = scmp.lt.s32.totalorder %s22, 1
        %s194 = scalar_select %p193, %s22, 1
        %s195 = smul.addr %s194, 8
        %s196 = scalar_lea.vmem %s2, %s195
        %p197 = pneg %p133
        %p198 = pneg %p130
        %s199 = sand.u32 %s120, 1
        %s200 = scalar_lea.sflag [#allocation4], %s199
        %s201 = sand.u32 %s120, 1
        %s202 = scalar_lea.vmem [#allocation3], %s201
        %p203 = scmp.lt.s32.totalorder %s22, 1
        %s204 = scalar_select %p203, %s22, 1
        %s205 = smul.addr %s204, 8
        %s206 = scalar_lea.vmem %s0, %s205
        %p207 = scmp.lt.s32.totalorder %s22, 1
        %s208 = scalar_select %p207, %s22, 1
        %p209 = scmp.lt.s32.totalorder %s23, 0
        %s210 = scalar_select %p209, %s23, 0
        %s211 = sadd.s32 %s210, %s208
        %s212 = smul.addr %s211, 8
        %s213 = scalar_lea.vmem %s1, %s212
        %p214 = scmp.lt.s32.totalorder %s22, 1
        %s215 = scalar_select %p214, %s22, 1
        %s216 = smul.addr %s215, 8
        %s217 = scalar_lea.vmem %s2, %s216
        %v218 = vld [vmem:[%s206] sm:$0xff]
        %v219 = vld [vmem:[%s213] sm:$0x1f]
        %vm220 = vcmask 39936
        %v222 = vsel %vm220, %v218, 0
        %vm224 = vcmask 1044480
        %v226 = vsel %vm224, %v219, 0
        %228 = vmatprep.subr.mxu0 0.0
        %229 = vmatpush1.msra.mxu0 %v226
        %230 = vmatprep.subr.mxu0 0.0
        %231 = vmatpush1.msra.mxu0 0.0
        %232 = vmatprep.subr.mxu0 0.0
        %233 = vmatpush1.msra.mxu0 0.0
        %234 = vmatprep.subr.mxu0 0.0
        %235 = vmatpush1.msra.mxu0 0.0
        %236 = vmatprep.subr.mxu0 0.0
        %237 = vmatpush1.msra.mxu0 0.0
        %238 = vmatprep.subr.mxu0 0.0
        %239 = vmatpush1.msra.mxu0 0.0
        %240 = vmatprep.subr.mxu0 0.0
        %241 = vmatpush1.msra.mxu0 0.0
        %242 = vmatprep.subr.mxu0 0.0
        %243 = vmatpush1.msra.mxu0 0.0
        %244 = vmatprep.subr.mxu0 0.0
        %245 = vmatpush1.msra.mxu0 0.0
        %246 = vmatprep.subr.mxu0 0.0
        %247 = vmatpush1.msra.mxu0 0.0
        %248 = vmatprep.subr.mxu0 0.0
        %249 = vmatpush1.msra.mxu0 0.0
        %250 = vmatprep.subr.mxu0 0.0
        %251 = vmatpush1.msra.mxu0 0.0
        %252 = vmatprep.subr.mxu0 0.0
        %253 = vmatpush1.msra.mxu0 0.0
        %254 = vmatprep.subr.mxu0 0.0
        %255 = vmatpush1.msra.mxu0 0.0
        %256 = vmatprep.subr.mxu0 0.0
        %257 = vmatpush1.msra.mxu0 0.0
        %258 = vmatprep.subr.mxu0 0.0
        %259 = vmatpush1.msra.mxu0 0.0
        %260 = vmatprep.subr.mxu0 0.0
        %261 = vmatpush1.msra.mxu0 0.0
        %262 = vmatprep.subr.mxu0 0.0
        %263 = vmatpush1.msra.mxu0 0.0
        %264 = vmatprep.subr.mxu0 0.0
        %265 = vmatpush1.msra.mxu0 0.0
        %266 = vmatprep.subr.mxu0 0.0
        %267 = vmatpush1.msra.mxu0 0.0
        %268 = vmatprep.subr.mxu0 0.0
        %269 = vmatpush1.msra.mxu0 0.0
        %270 = vmatprep.subr.mxu0 0.0
        %271 = vmatpush1.msra.mxu0 0.0
        %272 = vmatprep.subr.mxu0 0.0
        %273 = vmatpush1.msra.mxu0 0.0
        %274 = vmatprep.subr.mxu0 0.0
        %275 = vmatpush1.msra.mxu0 0.0
        %276 = vmatprep.subr.mxu0 0.0
        %277 = vmatpush1.msra.mxu0 0.0
        %278 = vmatprep.subr.mxu0 0.0
        %279 = vmatpush1.msra.mxu0 0.0
        %280 = vmatprep.subr.mxu0 0.0
        %281 = vmatpush1.msra.mxu0 0.0
        %282 = vmatprep.subr.mxu0 0.0
        %283 = vmatpush1.msra.mxu0 0.0
        %284 = vmatprep.subr.mxu0 0.0
        %285 = vmatpush1.msra.mxu0 0.0
        %286 = vmatprep.subr.mxu0 0.0
        %287 = vmatpush1.msra.mxu0 0.0
        %288 = vmatprep.subr.mxu0 0.0
        %289 = vmatpush1.msra.mxu0 0.0
        %290 = vmatprep.subr.mxu0 0.0
        %291 = vmatpush1.msra.mxu0 0.0
        %292 = vmatprep.mubr.f32.mxu0 0.0
        %293 = vmatmul.mubr.f32.gmra.mrb[0].mxu0 %v222
        %v294 = vpop.f32.mrb[0].mxu0
        %v295 = vadd.f32 0.0, %v294
        %v296 = vpop.f32.mrb[0].mxu0
        %297 = vdwg.mxu0
        %p298 = scmp.eq.s32.totalorder %s23, 0
        // Predicated region
        $region29: #{tpu_custom_call.1} parent=27 // pred_check
          %p299 = pneg %p298
        $region30: #{tpu_custom_call.1} parent=27 // pred_check_branch
          %301 = sbr.rel (%p299) target = $region32
        $region31: #{tpu_custom_call.1} parent=27 // pred_region
          %vm302 = vcmask 7168
          %303 = vst.msk [vmem:[#allocation2] sm:$0xff] %vm302, inf
        $region32: #{tpu_custom_call.1} parent=27 // pred_fallthru
          _
        %v304 = vld [vmem:[#allocation2] sm:$0xff]
        %vm305 = vcmask 64512
        %v306 = vsel %vm305, %v295, inf
        %307 = vmin.xlane.f32.xlu0 %v306
        %v308 = vpop.xlane.xlu0 %307
        %v309 = vmin.f32 %v304, %v308
        %vm310 = vcmask 7168
        %311 = vst.msk [vmem:[#allocation2] sm:$0xff] %vm310, %v309
        %v312 = vrot.slane %v306, 4
        %v313 = vmin.f32 %v306, %v312
        %v314 = vrot.slane %v313, 2
        %v315 = vmin.f32 %v313, %v314
        %v316 = vrot.slane %v315, 1
        %v317 = vmin.f32 %v315, %v316
        %v318 = vmax.f32 %v317, 0.0
        %vm319 = vcmask 57344
        %320 = vst.msk [vmem:[%s202] sm:$0x1] %vm319, %v318
        // Predicated region
        $region33: #{tpu_custom_call.1} parent=27 // pred_check
          %p321 = pneg %p298
        $region34: #{tpu_custom_call.1} parent=27 // pred_check_branch
          %323 = sbr.rel (%p321) target = $region36
        $region35: #{tpu_custom_call.1} parent=27 // pred_region
          %v324 = vld [vmem:[#allocation2] sm:$0xff]
          %v325 = vmax.f32 %v324, 0.0
          %326 = vst.msk [vmem:[%s217] sm:$0xff] %vm310, %v325
        $region36: #{tpu_custom_call.1} parent=27 // pred_fallthru
          _
        %p327 = scmp.lt.s32.totalorder %s22, 1
        %s328 = scalar_select %p327, %s22, 1
        %s329 = smul.addr %s328, 8
        %s330 = scalar_lea.vmem %s2, %s329
        %s331 = sand.u32 %s120, 1
        %s332 = scalar_lea.sflag [#allocation4], %s331
        %s333 = sand.u32 %s120, 1
        %s334 = scalar_lea.vmem [#allocation3], %s333
        // Predicated region
        $region37: #{tpu_custom_call.1} parent=27 // pred_check
          %p335 = pneg %p102
        $region38: #{tpu_custom_call.1} parent=27 // pred_check_branch
          %337 = sbr.rel (%p335) target = $region40
        $region39: #{tpu_custom_call.1} parent=27 // pred_region
          _
        $region40: #{tpu_custom_call.1} parent=27 // pred_fallthru
          _
        // Predicated region
        $region41: #{tpu_custom_call.1} parent=27 // pred_check
          %p338 = pneg %p130
        $region42: #{tpu_custom_call.1} parent=27 // pred_check_branch
          %340 = sbr.rel (%p338) target = $region44
        $region43: #{tpu_custom_call.1} parent=27 // pred_region
          %s342 = ssub.s32 16, 16
          %343 = vsyncadd %s332, %s342
          %s344 = sadd.s32 %s23, %s22
          %s345 = smul.addr %s344, 16
          %s346 = scalar_lea.hbm %s3, %s345
          %s348 = sshll.u32 %s334, 4
          %s349 = int_to_ptr.vmem [resolvable:$true] %s348
          %351 = dma.vmem_to_hbm [thread:$0]  %s349, 16, %s346, %s332
        $region44: #{tpu_custom_call.1} parent=27 // pred_fallthru
          _
      $region28: #{tpu_custom_call.1} parent=5 // pred_fallthru
        _
      %p352 = scmp.le.s32.totalorder 2, %s13
      // Predicated region
      $region45: #{tpu_custom_call.1} parent=5 // pred_check
        %p353 = pneg %p352
      $region46: #{tpu_custom_call.1} parent=5 // pred_check_branch
        %355 = sbr.rel (%p353) target = $region48
      $region47: #{tpu_custom_call.1} parent=5 // pred_region
        %s356 = ssub.s32 %s13, 2
        // Predicated region
        $region49: #{tpu_custom_call.1} parent=47 // pred_check
          %p357 = pneg %p108
        $region50: #{tpu_custom_call.1} parent=47 // pred_check_branch
          %359 = sbr.rel (%p357) target = $region52
        $region51: #{tpu_custom_call.1} parent=47 // pred_region
          %p360 = scmp.lt.s32.totalorder %s24, 1
          %s361 = scalar_select %p360, %s24, 1
          %s362 = smul.addr %s361, 8
          %s363 = scalar_lea.vmem %s2, %s362
        $region52: #{tpu_custom_call.1} parent=47 // pred_fallthru
          _
        // Predicated region
        $region53: #{tpu_custom_call.1} parent=47 // pred_check
          %p364 = pneg %p136
        $region54: #{tpu_custom_call.1} parent=47 // pred_check_branch
          %366 = sbr.rel (%p364) target = $region56
        $region55: #{tpu_custom_call.1} parent=47 // pred_region
          %s367 = sand.u32 %s121, 1
          %s368 = scalar_lea.sflag [#allocation4], %s367
          %s369 = sand.u32 %s121, 1
          %s370 = scalar_lea.vmem [#allocation3], %s369
          %371 = dma.done %s368, 16
        $region56: #{tpu_custom_call.1} parent=47 // pred_fallthru
          _
      $region48: #{tpu_custom_call.1} parent=5 // pred_fallthru
        _
    $region6: #{tpu_custom_call.1} parent=1 // loop_footer
      %s17 = sadd.s32 1, %s13
    $region7: #{tpu_custom_call.1} parent=1 // loop_footer_branch
      %12 = sbr.rel target = $region3
    $region8: #{tpu_custom_call.1} parent=1 // loop_exit
      _
    %372 = vsyncpa [#allocation4], 1
    %s373 = scalar_lea.sflag [#allocation4], 1
    %374 = vsyncpa %s373, 1

</llo_original>
